<compile_context>
chip_gen: v7x
topology: tpu7x:2x2x1
jax: 0.10.0
libtpu: 0.0.40
codegen_flags: <defaults>
</compile_context>

<pallas_src>
import jax
import jax.numpy as jnp
from jax.experimental import pallas as pl
from jax.experimental.pallas import tpu as pltpu


# ------------------------------ kernel bodies ------------------------------

def _hidden_bf16(x_ref, w1_ref, b1_ref, w2_ref, b2_ref):
    """h2 = ReLU(ReLU(x @ W1 + b1) @ W2 + b2), returned in bf16."""
    h1 = jnp.dot(x_ref[...], w1_ref[...],
                 preferred_element_type=jnp.float32) + b1_ref[...]
    h1 = jnp.maximum(h1, 0.0)
    h2 = jnp.dot(h1.astype(jnp.bfloat16), w2_ref[...],
                 preferred_element_type=jnp.float32) + b2_ref[...]
    return jnp.maximum(h2, 0.0).astype(jnp.bfloat16)


def _layer3_softplus(h2_bf16, w3_ref, b3_ref, o_ref, bf16_corr):
    """o = softplus(h2 @ W3 + b3) + 1e-15 (f32 accumulation, stable softplus)."""
    z = jnp.dot(h2_bf16, w3_ref[...],
                preferred_element_type=jnp.float32) + b3_ref[...]
    neg_abs = -jnp.abs(z)
    if bf16_corr:
        # Correction term is bounded by ln(2); bf16 error ~3e-3 is negligible
        # and this halves the EUP (exp/log1p) pushes on v6e/v7x.
        corr = jnp.log1p(jnp.exp(neg_abs.astype(jnp.bfloat16))).astype(jnp.float32)
    else:
        corr = jnp.log1p(jnp.exp(neg_abs))
    sp = jnp.maximum(z, 0.0) + corr
    o_ref[...] = (sp + 1e-15).astype(o_ref.dtype)


def _make_cached_kernel(bf16_corr):
    # h2 cached across the (sequential, "arbitrary") Dout axis.
    def kernel(x_ref, w1_ref, b1_ref, w2_ref, b2_ref, w3_ref, b3_ref,
               o_ref, h2_ref):
        @pl.when(pl.program_id(1) == 0)
        def _():
            h2_ref[...] = _hidden_bf16(x_ref, w1_ref, b1_ref, w2_ref, b2_ref)
        _layer3_softplus(h2_ref[...], w3_ref, b3_ref, o_ref, bf16_corr)
    return kernel


def _make_nocache_kernel(bf16_corr):
    # h2 recomputed per Dout tile -> safe to mark the Dout axis "parallel"
    # (v7x megacore) since there is no cross-tile scratch dependence.
    def kernel(x_ref, w1_ref, b1_ref, w2_ref, b2_ref, w3_ref, b3_ref, o_ref):
        h2 = _hidden_bf16(x_ref, w1_ref, b1_ref, w2_ref, b2_ref)
        _layer3_softplus(h2, w3_ref, b3_ref, o_ref, bf16_corr)
    return kernel


# ------------------------------- wrapper -----------------------------------

def _round_up(x, m):
    return ((x + m - 1) // m) * m


def _device_kind():
    try:
        return jax.devices()[0].device_kind.lower()
    except Exception:
        return "unknown"


def _select_config(kind):
    """Generation-aware tile sizes / VMEM limit."""
    if "v7" in kind:
        # 64 MiB physical VMEM: out double-buffer 512*4096*4*2 = 16 MB,
        # W3 tiles 4 MB, weights/scratch small -> well under 48 MB.
        return 512, 4096, 48 * 1024 * 1024, True
    if "v6" in kind:
        return 1024, 4096, 96 * 1024 * 1024, False
    if "v5" in kind:
        # v5e: no bf16 EUP -> keep softplus correction in f32.
        return 1024, 4096, 96 * 1024 * 1024, False
    # Unknown backend: conservative.
    return 512, 2048, 48 * 1024 * 1024, False


def pois_forward(x, params, *, block_b=None, block_n=None,
                 out_dtype=jnp.float32):
    """x: (B, input_dim) float32. params: dict of transposed weights/biases."""
    w1, b1, w2, b2, w3, b3 = (params["w1"], params["b1"], params["w2"],
                              params["b2"], params["w3"], params["b3"])
    B, Din = x.shape
    H = w1.shape[1]
    Dout = w3.shape[1]

    kind = _device_kind()
    cfg_bb, cfg_bn, vmem_limit, is_v7 = _select_config(kind)
    if block_b is None:
        block_b = cfg_bb
    if block_n is None:
        block_n = cfg_bn
    # bf16 softplus correction term everywhere except v5 (no bf16 EUP) /
    # unknown; result is within ~3e-3 of f32 either way.
    bf16_corr = ("v6" in kind) or ("v7" in kind)

    # Sublane/lane-dense tile sizes ((8, 128) divisibility rule).
    block_b = _round_up(min(block_b, _round_up(B, 8)), 8)
    block_n = _round_up(min(block_n, _round_up(Dout, 128)), 128)
    B_p = _round_up(B, block_b)
    Dout_p = _round_up(Dout, block_n)
    Din_p = _round_up(Din, 128)   # lane-dense x / full-depth L1 MXU pass

    # Zero-padding: batch rows of x, Din columns of x / rows of W1, Dout
    # columns of W3/b3. Padded outputs are sliced off below.
    if B_p != B or Din_p != Din:
        x = jnp.pad(x, ((0, B_p - B), (0, Din_p - Din)))
    if Din_p != Din:
        w1 = jnp.pad(w1, ((0, Din_p - Din), (0, 0)))
    if Dout_p != Dout:
        w3 = jnp.pad(w3, ((0, 0), (0, Dout_p - Dout)))
        b3 = jnp.pad(b3, ((0, 0), (0, Dout_p - Dout)))

    # bf16 matmul inputs (accumulation stays f32 in-kernel); biases stay f32.
    x = x.astype(jnp.bfloat16)
    w1 = w1.astype(jnp.bfloat16)
    w2 = w2.astype(jnp.bfloat16)
    w3 = w3.astype(jnp.bfloat16)

    nb = B_p // block_b
    nd = Dout_p // block_n
    grid = (nb, nd)

    # On v7x (2 TensorCores), if the batch axis alone can't feed both cores,
    # drop the h2 cache (recompute per Dout tile) and parallelize the Dout
    # axis instead. On 1-TC chips the cached variant is strictly better.
    use_cache = not (is_v7 and nb == 1 and nd >= 2)

    out_bytes = jnp.dtype(out_dtype).itemsize
    hidden_flops = 2 * B_p * (Din_p * H + H * H)
    cost = pl.CostEstimate(
        flops=(hidden_flops if use_cache else nd * hidden_flops)
              + 2 * B_p * Dout_p * H,
        transcendentals=2 * B_p * Dout_p,               # exp + log1p per element
        bytes_accessed=(B_p * Din_p * 2                 # x (bf16, once/batch tile)
                        + Din_p * H * 2 + H * H * 2     # W1, W2 (resident)
                        + 2 * H * 4                     # b1, b2
                        + nb * (H * Dout_p * 2 + Dout_p * 4)  # W3/b3 re-streams
                        + B_p * Dout_p * out_bytes),    # output stream
    )

    in_specs = [
        pl.BlockSpec((block_b, Din_p), lambda i, j: (i, 0)),   # x tile
        pl.BlockSpec((Din_p, H),       lambda i, j: (0, 0)),   # W1 (resident)
        pl.BlockSpec((1, H),           lambda i, j: (0, 0)),   # b1
        pl.BlockSpec((H, H),           lambda i, j: (0, 0)),   # W2 (resident)
        pl.BlockSpec((1, H),           lambda i, j: (0, 0)),   # b2
        pl.BlockSpec((H, block_n),     lambda i, j: (0, j)),   # W3 tile
        pl.BlockSpec((1, block_n),     lambda i, j: (0, j)),   # b3 tile
    ]
    out_spec = pl.BlockSpec((block_b, block_n), lambda i, j: (i, j))

    if use_cache:
        kernel = _make_cached_kernel(bf16_corr)
        scratch = [pltpu.VMEM((block_b, H), jnp.bfloat16)]      # cached h2
        # The Dout axis carries the h2 scratch -> must stay sequential.
        semantics = ("parallel", "arbitrary")
    else:
        kernel = _make_nocache_kernel(bf16_corr)
        scratch = []
        semantics = ("parallel", "parallel")

    out = pl.pallas_call(
        kernel,
        out_shape=jax.ShapeDtypeStruct((B_p, Dout_p), out_dtype),
        grid_spec=pltpu.PrefetchScalarGridSpec(
            num_scalar_prefetch=0,
            grid=grid,
            in_specs=in_specs,
            out_specs=out_spec,
            scratch_shapes=scratch,
        ),
        compiler_params=pltpu.CompilerParams(
            dimension_semantics=semantics,
            vmem_limit_bytes=vmem_limit,
        ),
        cost_estimate=cost,
    )(x, w1, b1, w2, b2, w3, b3)

    return out[:B, :Dout]


# ------------------------------ params / ref --------------------------------

def init_pois_params(key, input_dim, output_dim, hidden_dim=128):
    """Deterministic PyTorch-style init (uniform +-1/sqrt(fan_in)).

    Weights are stored already transposed to (in, out); biases as (1, out).
    """
    ks = jax.random.split(key, 6)

    def linear(kw, kb, fan_in, fan_out):
        bound = 1.0 / jnp.sqrt(fan_in)
        w = jax.random.uniform(kw, (fan_in, fan_out), jnp.float32, -bound, bound)
        b = jax.random.uniform(kb, (1, fan_out), jnp.float32, -bound, bound)
        return w, b

    w1, b1 = linear(ks[0], ks[1], input_dim, hidden_dim)
    w2, b2 = linear(ks[2], ks[3], hidden_dim, hidden_dim)
    w3, b3 = linear(ks[4], ks[5], hidden_dim, output_dim)
    return dict(w1=w1, b1=b1, w2=w2, b2=b2, w3=w3, b3=b3)


def pois_reference(x, params):
    """Pure-JAX f32 reference for correctness check."""
    h1 = jnp.maximum(x @ params["w1"] + params["b1"], 0.0)
    h2 = jnp.maximum(h1 @ params["w2"] + params["b2"], 0.0)
    z = h2 @ params["w3"] + params["b3"]
    return jax.nn.softplus(z) + 1e-15


if __name__ == "__main__":
    key = jax.random.PRNGKey(0)
    k_params, k_x = jax.random.split(key)

    # Small shapes consistent with the module: latent dim -> gene counts.
    batch, input_dim, hidden_dim, output_dim = 8, 8, 32, 16

    params = init_pois_params(k_params, input_dim, output_dim, hidden_dim)
    x = jax.random.normal(k_x, (batch, input_dim), dtype=jnp.float32)

    out = pois_forward(x, params)
    out = jax.block_until_ready(out)

    ref = pois_reference(x, params)
    assert out.shape == (batch, output_dim)
    # bf16 matmul inputs / bf16 softplus correction (f32 accumulation)
    # -> loosen tolerance vs f32 reference.
    assert jnp.allclose(out, ref, atol=5e-2, rtol=5e-2), "mismatch vs reference"
    assert bool(jnp.all(out > 0.0)), "Poisson rates must be strictly positive"

    print("KERNEL_OK")
</pallas_src>

<mosaic_0001>
module attributes {stable_mosaic.version = 11 : i64} {
  func.func @kernel(%arg0: i32, %arg1: i32, %arg2: memref<8x128xbf16, #tpu.memory_space<vmem>>, %arg3: memref<128x32xbf16, #tpu.memory_space<vmem>>, %arg4: memref<1x32xf32, #tpu.memory_space<vmem>>, %arg5: memref<32x32xbf16, #tpu.memory_space<vmem>>, %arg6: memref<1x32xf32, #tpu.memory_space<vmem>>, %arg7: memref<32x128xbf16, #tpu.memory_space<vmem>>, %arg8: memref<1x128xf32, #tpu.memory_space<vmem>>, %arg9: memref<8x128xf32, #tpu.memory_space<vmem>>, %arg10: memref<8x32xbf16, #tpu.memory_space<vmem>>) attributes {dimension_semantics = [#tpu.dimension_semantics<parallel>, #tpu.dimension_semantics<arbitrary>], iteration_bounds = array<i64: 1, 1>, scalar_prefetch = 0 : i64, scratch_operands = 1 : i64, tpu.core_type = #tpu.core_type<tc>, window_params = [{transform_indices = @transform_0, window_bounds = array<i64: 8, 128>}, {pipeline_mode = #tpu.pipeline_mode<synchronous>, transform_indices = @transform_1, window_bounds = array<i64: 128, 32>}, {pipeline_mode = #tpu.pipeline_mode<synchronous>, transform_indices = @transform_2, window_bounds = array<i64: 1, 32>}, {pipeline_mode = #tpu.pipeline_mode<synchronous>, transform_indices = @transform_3, window_bounds = array<i64: 32, 32>}, {pipeline_mode = #tpu.pipeline_mode<synchronous>, transform_indices = @transform_4, window_bounds = array<i64: 1, 32>}, {transform_indices = @transform_5, window_bounds = array<i64: 32, 128>}, {transform_indices = @transform_6, window_bounds = array<i64: 1, 128>}, {transform_indices = @transform_7, window_bounds = array<i64: 8, 128>}]} {
    %c0_i32 = arith.constant 0 : i32
    %0 = arith.cmpi eq, %arg1, %c0_i32 : i32
    %1 = arith.extui %0 : i1 to i32
    %c0_i32_0 = arith.constant 0 : i32
    %2 = arith.cmpi ne, %1, %c0_i32_0 : i32
    scf.if %2 {
      %c0_11 = arith.constant 0 : index
      %c0_12 = arith.constant 0 : index
      %20 = vector.load %arg2[%c0_11, %c0_12] : memref<8x128xbf16, #tpu.memory_space<vmem>>, vector<8x128xbf16>
      %c0_13 = arith.constant 0 : index
      %c0_14 = arith.constant 0 : index
      %21 = vector.load %arg3[%c0_13, %c0_14] : memref<128x32xbf16, #tpu.memory_space<vmem>>, vector<128x32xbf16>
      %cst_15 = arith.constant dense<0.000000e+00> : vector<8x32xf32>
      %22 = tpu.matmul %20, %21, %cst_15 {dimension_numbers = #tpu.dot_dimension_numbers<[1], [0], [0], [1], [0, 0, 1, 1], [], []>} : vector<8x128xbf16>, vector<128x32xbf16>, vector<8x32xf32> -> vector<8x32xf32>
      %c0_16 = arith.constant 0 : index
      %c0_17 = arith.constant 0 : index
      %23 = vector.load %arg4[%c0_16, %c0_17] : memref<1x32xf32, #tpu.memory_space<vmem>>, vector<1x32xf32>
      %24 = vector.broadcast %23 : vector<1x32xf32> to vector<8x32xf32>
      %25 = arith.addf %22, %24 : vector<8x32xf32>
      %cst_18 = arith.constant 0.000000e+00 : f32
      %26 = vector.broadcast %cst_18 : f32 to vector<8x32xf32>
      %27 = arith.maximumf %25, %26 : vector<8x32xf32>
      %28 = arith.truncf %27 : vector<8x32xf32> to vector<8x32xbf16>
      %c0_19 = arith.constant 0 : index
      %c0_20 = arith.constant 0 : index
      %29 = vector.load %arg5[%c0_19, %c0_20] : memref<32x32xbf16, #tpu.memory_space<vmem>>, vector<32x32xbf16>
      %cst_21 = arith.constant dense<0.000000e+00> : vector<8x32xf32>
      %30 = tpu.matmul %28, %29, %cst_21 {dimension_numbers = #tpu.dot_dimension_numbers<[1], [0], [0], [1], [0, 0, 1, 1], [], []>} : vector<8x32xbf16>, vector<32x32xbf16>, vector<8x32xf32> -> vector<8x32xf32>
      %c0_22 = arith.constant 0 : index
      %c0_23 = arith.constant 0 : index
      %31 = vector.load %arg6[%c0_22, %c0_23] : memref<1x32xf32, #tpu.memory_space<vmem>>, vector<1x32xf32>
      %32 = vector.broadcast %31 : vector<1x32xf32> to vector<8x32xf32>
      %33 = arith.addf %30, %32 : vector<8x32xf32>
      %cst_24 = arith.constant 0.000000e+00 : f32
      %34 = vector.broadcast %cst_24 : f32 to vector<8x32xf32>
      %35 = arith.maximumf %33, %34 : vector<8x32xf32>
      %36 = arith.truncf %35 : vector<8x32xf32> to vector<8x32xbf16>
      %c0_25 = arith.constant 0 : index
      %c0_26 = arith.constant 0 : index
      %37 = vector.load %arg10[%c0_25, %c0_26] : memref<8x32xbf16, #tpu.memory_space<vmem>>, vector<8x32xbf16>
      tpu.vector_store %arg10[%c0_25, %c0_26], %36 {strides = array<i32>} : memref<8x32xbf16, #tpu.memory_space<vmem>>, vector<8x32xbf16>,
    } else {
    }
    %c0 = arith.constant 0 : index
    %c0_1 = arith.constant 0 : index
    %3 = vector.load %arg10[%c0, %c0_1] : memref<8x32xbf16, #tpu.memory_space<vmem>>, vector<8x32xbf16>
    %c0_2 = arith.constant 0 : index
    %c0_3 = arith.constant 0 : index
    %4 = vector.load %arg7[%c0_2, %c0_3] : memref<32x128xbf16, #tpu.memory_space<vmem>>, vector<32x128xbf16>
    %cst = arith.constant dense<0.000000e+00> : vector<8x128xf32>
    %5 = tpu.matmul %3, %4, %cst {dimension_numbers = #tpu.dot_dimension_numbers<[1], [0], [0], [1], [0, 0, 1, 1], [], []>} : vector<8x32xbf16>, vector<32x128xbf16>, vector<8x128xf32> -> vector<8x128xf32>
    %c0_4 = arith.constant 0 : index
    %c0_5 = arith.constant 0 : index
    %6 = vector.load %arg8[%c0_4, %c0_5] : memref<1x128xf32, #tpu.memory_space<vmem>>, vector<1x128xf32>
    %7 = vector.broadcast %6 : vector<1x128xf32> to vector<8x128xf32>
    %8 = arith.addf %5, %7 : vector<8x128xf32>
    %9 = math.absf %8 : vector<8x128xf32>
    %cst_6 = arith.constant 0.000000e+00 : f32
    %10 = vector.broadcast %cst_6 : f32 to vector<8x128xf32>
    %11 = arith.subf %10, %9 : vector<8x128xf32>
    %12 = math.exp %11 : vector<8x128xf32>
    %13 = math.log1p %12 : vector<8x128xf32>
    %cst_7 = arith.constant 0.000000e+00 : f32
    %14 = vector.broadcast %cst_7 : f32 to vector<8x128xf32>
    %15 = arith.maximumf %8, %14 : vector<8x128xf32>
    %16 = arith.addf %15, %13 : vector<8x128xf32>
    %cst_8 = arith.constant 1.000000e-15 : f32
    %17 = vector.broadcast %cst_8 : f32 to vector<8x128xf32>
    %18 = arith.addf %16, %17 : vector<8x128xf32>
    %c0_9 = arith.constant 0 : index
    %c0_10 = arith.constant 0 : index
    %19 = vector.load %arg9[%c0_9, %c0_10] : memref<8x128xf32, #tpu.memory_space<vmem>>, vector<8x128xf32>
    tpu.vector_store %arg9[%c0_9, %c0_10], %18 {strides = array<i32>} : memref<8x128xf32, #tpu.memory_space<vmem>>, vector<8x128xf32>,
    return
  }
  func.func @transform_0(%arg0: i32, %arg1: i32) -> (i32, i32) {
    %c0_i32 = arith.constant 0 : i32
    %c0_i32_0 = arith.constant 0 : i32
    return %arg0, %c0_i32 : i32, i32
  }
  func.func @transform_1(%arg0: i32, %arg1: i32) -> (i32, i32) {
    %c0_i32 = arith.constant 0 : i32
    %c0_i32_0 = arith.constant 0 : i32
    %c0_i32_1 = arith.constant 0 : i32
    return %c0_i32, %c0_i32_0 : i32, i32
  }
  func.func @transform_2(%arg0: i32, %arg1: i32) -> (i32, i32) {
    %c0_i32 = arith.constant 0 : i32
    %c0_i32_0 = arith.constant 0 : i32
    %c0_i32_1 = arith.constant 0 : i32
    return %c0_i32, %c0_i32_0 : i32, i32
  }
  func.func @transform_3(%arg0: i32, %arg1: i32) -> (i32, i32) {
    %c0_i32 = arith.constant 0 : i32
    %c0_i32_0 = arith.constant 0 : i32
    %c0_i32_1 = arith.constant 0 : i32
    return %c0_i32, %c0_i32_0 : i32, i32
  }
  func.func @transform_4(%arg0: i32, %arg1: i32) -> (i32, i32) {
    %c0_i32 = arith.constant 0 : i32
    %c0_i32_0 = arith.constant 0 : i32
    %c0_i32_1 = arith.constant 0 : i32
    return %c0_i32, %c0_i32_0 : i32, i32
  }
  func.func @transform_5(%arg0: i32, %arg1: i32) -> (i32, i32) {
    %c0_i32 = arith.constant 0 : i32
    %c0_i32_0 = arith.constant 0 : i32
    return %c0_i32, %arg1 : i32, i32
  }
  func.func @transform_6(%arg0: i32, %arg1: i32) -> (i32, i32) {
    %c0_i32 = arith.constant 0 : i32
    %c0_i32_0 = arith.constant 0 : i32
    return %c0_i32, %arg1 : i32, i32
  }
  func.func @transform_7(%arg0: i32, %arg1: i32) -> (i32, i32) {
    %c0_i32 = arith.constant 0 : i32
    return %arg0, %arg1 : i32, i32
  }
}

</mosaic_0001>

<llo_original>
// kernel: tpu_custom_call.1
$region0: #{tpu_custom_call.1}
  #allocation0 [shape = 'u32[]', space=smem, size = 0x4, offset = 0x4, fixed_abs, tag = 'smem constant byte address 0x4 - core index']
  #allocation1 [shape = 'u32[144,128]{1,0:T(1,128)}', space=vmem, size = 0x12000, scoped, tag = 'internal scratch']
  #allocation2 [shape = 'bf16[8,32]{1,0:T(8,128)(2,1)}', space=vmem, size = 0x800, scoped, tag = 'scratch operand']
  %s0 = inlined_call_operand.vmem [shape: bf16[8,128], index: 0, kind: input, shape index: {}]
  %s1 = inlined_call_operand.vmem [shape: bf16[128,32], index: 1, kind: input, shape index: {}]
  %s2 = inlined_call_operand.vmem [shape: f32[1,32], index: 2, kind: input, shape index: {}]
  %s3 = inlined_call_operand.vmem [shape: bf16[32,32], index: 3, kind: input, shape index: {}]
  %s4 = inlined_call_operand.vmem [shape: f32[1,32], index: 4, kind: input, shape index: {}]
  %s5 = inlined_call_operand.vmem [shape: bf16[32,128], index: 5, kind: input, shape index: {}]
  %s6 = inlined_call_operand.vmem [shape: f32[1,128], index: 6, kind: input, shape index: {}]
  %s7 = inlined_call_operand.hbm [shape: f32[8,128], index: 7, kind: output, shape index: {}]
  %s8 = sld [smem:[#allocation0]]
  $region42: #{tpu_custom_call.1} parent=0
    _
  %s10 = ssub.s32 1, %s8
  %s11 = scalar_select 0, %s10, %s8
  $region1: #{tpu_custom_call.1} parent=0
    #allocation3 [shape = 'u8[4096]{0}', space=vmem, size = 0x1000, scoped, tag = 'output window, operand 0, single buffered']
    #allocation4 [shape = 's32[1]{0}', space=sflag, size = 0x4, scoped, tag = 'scoped memory for tpu_custom_call.1']
    %12 = vsyncpa [#allocation4], 0
    // Predicated region
    $region2: #{tpu_custom_call.1} parent=1 // pred_check
      _
    $region3: #{tpu_custom_call.1} parent=1 // pred_check_branch
      %14 = sbr.rel (0) target = $region5
    $region4: #{tpu_custom_call.1} parent=1 // pred_region
      _
    $region5: #{tpu_custom_call.1} parent=1 // pred_fallthru
      _
    // Predicated region
    $region6: #{tpu_custom_call.1} parent=1 // pred_check
      _
    $region7: #{tpu_custom_call.1} parent=1 // pred_check_branch
      %16 = sbr.rel (0) target = $region9
    $region8: #{tpu_custom_call.1} parent=1 // pred_region
      _
    $region9: #{tpu_custom_call.1} parent=1 // pred_fallthru
      _
    // Predicated region
    $region10: #{tpu_custom_call.1} parent=1 // pred_check
      _
    $region11: #{tpu_custom_call.1} parent=1 // pred_check_branch
      %18 = sbr.rel (0) target = $region13
    $region12: #{tpu_custom_call.1} parent=1 // pred_region
      _
    $region13: #{tpu_custom_call.1} parent=1 // pred_fallthru
      _
    // Predicated region
    $region14: #{tpu_custom_call.1} parent=1 // pred_check
      _
    $region15: #{tpu_custom_call.1} parent=1 // pred_check_branch
      %20 = sbr.rel (0) target = $region17
    $region16: #{tpu_custom_call.1} parent=1 // pred_region
      _
    $region17: #{tpu_custom_call.1} parent=1 // pred_fallthru
      _
    // Predicated region
    $region18: #{tpu_custom_call.1} parent=1 // pred_check
      _
    $region19: #{tpu_custom_call.1} parent=1 // pred_check_branch
      %22 = sbr.rel (0) target = $region21
    $region20: #{tpu_custom_call.1} parent=1 // pred_region
      _
    $region21: #{tpu_custom_call.1} parent=1 // pred_fallthru
      _
    // Predicated region
    $region22: #{tpu_custom_call.1} parent=1 // pred_check
      _
    $region23: #{tpu_custom_call.1} parent=1 // pred_check_branch
      %24 = sbr.rel (0) target = $region25
    $region24: #{tpu_custom_call.1} parent=1 // pred_region
      _
    $region25: #{tpu_custom_call.1} parent=1 // pred_fallthru
      _
    // Predicated region
    $region26: #{tpu_custom_call.1} parent=1 // pred_check
      _
    $region27: #{tpu_custom_call.1} parent=1 // pred_check_branch
      %26 = sbr.rel (0) target = $region29
    $region28: #{tpu_custom_call.1} parent=1 // pred_region
      _
    $region29: #{tpu_custom_call.1} parent=1 // pred_fallthru
      _
    %p28 = scmp.eq.s32.totalorder 0, 0
    // Predicated region
    $region30: #{tpu_custom_call.1} parent=1 // pred_check
      %p29 = pneg %p28
    $region31: #{tpu_custom_call.1} parent=1 // pred_check_branch
      %31 = sbr.rel (%p29) target = $region33
    $region32: #{tpu_custom_call.1} parent=1 // pred_region
      %v32 = vld [vmem:[%s0] sm:$0xf]
      %v33 = vld [vmem:[%s1] sm:$0xf]
      %v34 = vld [vmem:[%s1 + $0x4] sm:$0xf]
      %v35 = vld [vmem:[%s1 + $0x8] sm:$0xf]
      %v36 = vld [vmem:[%s1 + $0xc] sm:$0xf]
      %v37 = vld [vmem:[%s1 + $0x10] sm:$0xf]
      %v38 = vld [vmem:[%s1 + $0x14] sm:$0xf]
      %v39 = vld [vmem:[%s1 + $0x18] sm:$0xf]
      %v40 = vld [vmem:[%s1 + $0x1c] sm:$0xf]
      %v41 = vld [vmem:[%s1 + $0x20] sm:$0xf]
      %v42 = vld [vmem:[%s1 + $0x24] sm:$0xf]
      %v43 = vld [vmem:[%s1 + $0x28] sm:$0xf]
      %v44 = vld [vmem:[%s1 + $0x2c] sm:$0xf]
      %v45 = vld [vmem:[%s1 + $0x30] sm:$0xf]
      %v46 = vld [vmem:[%s1 + $0x34] sm:$0xf]
      %v47 = vld [vmem:[%s1 + $0x38] sm:$0xf]
      %v48 = vld [vmem:[%s1 + $0x3c] sm:$0xf]
      %v49 = vld [vmem:[%s2] sm:$0x1]
      %v51 = vlaneseq
      %v52 = vshrl.u32 %v51, 7
      %v53 = vsub.s32 0, %v52
      %v54 = vrot.slane %v49, %v53
      %v72 = vunpack.c.l.b16 %v33
      %v73 = vunpack.c.l.b16 %v34
      %v74 = vunpack.c.l.b16 %v35
      %v75 = vunpack.c.l.b16 %v36
      %v76 = vunpack.c.l.b16 %v37
      %v77 = vunpack.c.l.b16 %v38
      %v78 = vunpack.c.l.b16 %v39
      %v79 = vunpack.c.l.b16 %v40
      %v80 = vunpack.c.l.b16 %v41
      %v81 = vunpack.c.l.b16 %v42
      %v82 = vunpack.c.l.b16 %v43
      %v83 = vunpack.c.l.b16 %v44
      %v84 = vunpack.c.l.b16 %v45
      %v85 = vunpack.c.l.b16 %v46
      %v86 = vunpack.c.l.b16 %v47
      %v87 = vunpack.c.l.b16 %v48
      %v88 = vpack.c.b16 %v73, %v72
      %v89 = vpack.c.b16 %v75, %v74
      %v90 = vpack.c.b16 %v77, %v76
      %v91 = vpack.c.b16 %v79, %v78
      %v92 = vpack.c.b16 %v81, %v80
      %v93 = vpack.c.b16 %v83, %v82
      %v94 = vpack.c.b16 %v85, %v84
      %v95 = vpack.c.b16 %v87, %v86
      %104 = vmatprep.subr.bf16.mxu0 0
      %105 = vmatpush1.bf16.msra.mxu0 %v88
      %106 = vmatprep.subr.bf16.mxu0 0
      %107 = vmatpush1.bf16.msra.mxu0 %v89
      %108 = vmatprep.subr.bf16.mxu0 0
      %109 = vmatpush1.bf16.msra.mxu0 %v90
      %110 = vmatprep.subr.bf16.mxu0 0
      %111 = vmatpush1.bf16.msra.mxu0 %v91
      %112 = vmatprep.subr.bf16.mxu0 0
      %113 = vmatpush1.bf16.msra.mxu0 %v92
      %114 = vmatprep.subr.bf16.mxu0 0
      %115 = vmatpush1.bf16.msra.mxu0 %v93
      %116 = vmatprep.subr.bf16.mxu0 0
      %117 = vmatpush1.bf16.msra.mxu0 %v94
      %118 = vmatprep.subr.bf16.mxu0 0
      %119 = vmatpush1.bf16.msra.mxu0 %v95
      %120 = vmatprep.subr.bf16.mxu0 0
      %121 = vmatpush1.bf16.msra.mxu0 0
      %122 = vmatprep.subr.bf16.mxu0 0
      %123 = vmatpush1.bf16.msra.mxu0 0
      %124 = vmatprep.subr.bf16.mxu0 0
      %125 = vmatpush1.bf16.msra.mxu0 0
      %126 = vmatprep.subr.bf16.mxu0 0
      %127 = vmatpush1.bf16.msra.mxu0 0
      %128 = vmatprep.subr.bf16.mxu0 0
      %129 = vmatpush1.bf16.msra.mxu0 0
      %130 = vmatprep.subr.bf16.mxu0 0
      %131 = vmatpush1.bf16.msra.mxu0 0
      %132 = vmatprep.subr.bf16.mxu0 0
      %133 = vmatpush1.bf16.msra.mxu0 0
      %134 = vmatprep.subr.bf16.mxu0 0
      %135 = vmatpush1.bf16.msra.mxu0 0
      %136 = vmatprep.mubr.bf16.mxu0 0
      %137 = vmatmul.mubr.bf16.gmra.mrb[0].mxu0 %v32
      %v138 = vpop.f32.mrb[0].mxu0
      %v139 = vadd.f32 %v54, %v138
      %v140 = vpop.f32.mrb[0].mxu0
      %v141 = vpop.f32.mrb[0].mxu0
      %v142 = vpop.f32.mrb[0].mxu0
      %143 = vdwg.mxu0
      %v144 = vmax.f32 %v139, 0.0
      %v145 = vpack.c.bf16 %v144, %v144
      %v146 = vld [vmem:[%s3] sm:$0xf]
      %v147 = vld [vmem:[%s3 + $0x4] sm:$0xf]
      %v148 = vld [vmem:[%s3 + $0x8] sm:$0xf]
      %v149 = vld [vmem:[%s3 + $0xc] sm:$0xf]
      %v150 = vld [vmem:[%s4] sm:$0x1]
      %v152 = vlaneseq
      %v153 = vshrl.u32 %v152, 7
      %v154 = vsub.s32 0, %v153
      %v155 = vrot.slane %v150, %v154
      %v161 = vunpack.c.l.b16 %v146
      %v162 = vunpack.c.l.b16 %v147
      %v163 = vunpack.c.l.b16 %v148
      %v164 = vunpack.c.l.b16 %v149
      %v165 = vpack.c.b16 %v162, %v161
      %v166 = vpack.c.b16 %v164, %v163
      %vm169 = vcmask 261120
      %v171 = vsel %vm169, %v145, 0
      %173 = vmatprep.subr.bf16.mxu0 0
      %174 = vmatpush1.bf16.msra.mxu0 %v165
      %175 = vmatprep.subr.bf16.mxu0 0
      %176 = vmatpush1.bf16.msra.mxu0 %v166
      %177 = vmatprep.subr.bf16.mxu0 0
      %178 = vmatpush1.bf16.msra.mxu0 0
      %179 = vmatprep.subr.bf16.mxu0 0
      %180 = vmatpush1.bf16.msra.mxu0 0
      %181 = vmatprep.subr.bf16.mxu0 0
      %182 = vmatpush1.bf16.msra.mxu0 0
      %183 = vmatprep.subr.bf16.mxu0 0
      %184 = vmatpush1.bf16.msra.mxu0 0
      %185 = vmatprep.subr.bf16.mxu0 0
      %186 = vmatpush1.bf16.msra.mxu0 0
      %187 = vmatprep.subr.bf16.mxu0 0
      %188 = vmatpush1.bf16.msra.mxu0 0
      %189 = vmatprep.subr.bf16.mxu0 0
      %190 = vmatpush1.bf16.msra.mxu0 0
      %191 = vmatprep.subr.bf16.mxu0 0
      %192 = vmatpush1.bf16.msra.mxu0 0
      %193 = vmatprep.subr.bf16.mxu0 0
      %194 = vmatpush1.bf16.msra.mxu0 0
      %195 = vmatprep.subr.bf16.mxu0 0
      %196 = vmatpush1.bf16.msra.mxu0 0
      %197 = vmatprep.subr.bf16.mxu0 0
      %198 = vmatpush1.bf16.msra.mxu0 0
      %199 = vmatprep.subr.bf16.mxu0 0
      %200 = vmatpush1.bf16.msra.mxu0 0
      %201 = vmatprep.subr.bf16.mxu0 0
      %202 = vmatpush1.bf16.msra.mxu0 0
      %203 = vmatprep.subr.bf16.mxu0 0
      %204 = vmatpush1.bf16.msra.mxu0 0
      %205 = vmatprep.mubr.bf16.mxu0 0
      %206 = vmatmul.mubr.bf16.gmra.mrb[0].mxu0 %v171
      %v207 = vpop.f32.mrb[0].mxu0
      %v208 = vadd.f32 %v155, %v207
      %v209 = vpop.f32.mrb[0].mxu0
      %v210 = vpop.f32.mrb[0].mxu0
      %v211 = vpop.f32.mrb[0].mxu0
      %212 = vdwg.mxu0
      %v213 = vmax.f32 %v208, 0.0
      %v214 = vpack.c.bf16 %v213, %v213
      %vm215 = vcmask 257024
      %216 = vst.msk [vmem:[#allocation2] sm:$0xf] %vm215, %v214
    $region33: #{tpu_custom_call.1} parent=1 // pred_fallthru
      _
    %v217 = vld [vmem:[#allocation2] sm:$0xf]
    %v218 = vld [vmem:[%s5] sm:$0xf]
    %v219 = vld [vmem:[%s5 + $0x4] sm:$0xf]
    %v220 = vld [vmem:[%s5 + $0x8] sm:$0xf]
    %v221 = vld [vmem:[%s5 + $0xc] sm:$0xf]
    %v222 = vld [vmem:[%s6] sm:$0x1]
    %v224 = vlaneseq
    %v225 = vshrl.u32 %v224, 7
    %v226 = vsub.s32 0, %v225
    %v227 = vrot.slane %v222, %v226
    %v233 = vunpack.c.l.b16 %v218
    %v234 = vunpack.c.l.b16 %v219
    %v235 = vunpack.c.l.b16 %v220
    %v236 = vunpack.c.l.b16 %v221
    %v237 = vpack.c.b16 %v234, %v233
    %v238 = vpack.c.b16 %v236, %v235
    %vm241 = vcmask 261120
    %v243 = vsel %vm241, %v217, 0
    %245 = vmatprep.subr.bf16.mxu0 0
    %246 = vmatpush1.bf16.msra.mxu0 %v237
    %247 = vmatprep.subr.bf16.mxu0 0
    %248 = vmatpush1.bf16.msra.mxu0 %v238
    %249 = vmatprep.subr.bf16.mxu0 0
    %250 = vmatpush1.bf16.msra.mxu0 0
    %251 = vmatprep.subr.bf16.mxu0 0
    %252 = vmatpush1.bf16.msra.mxu0 0
    %253 = vmatprep.subr.bf16.mxu0 0
    %254 = vmatpush1.bf16.msra.mxu0 0
    %255 = vmatprep.subr.bf16.mxu0 0
    %256 = vmatpush1.bf16.msra.mxu0 0
    %257 = vmatprep.subr.bf16.mxu0 0
    %258 = vmatpush1.bf16.msra.mxu0 0
    %259 = vmatprep.subr.bf16.mxu0 0
    %260 = vmatpush1.bf16.msra.mxu0 0
    %261 = vmatprep.subr.bf16.mxu0 0
    %262 = vmatpush1.bf16.msra.mxu0 0
    %263 = vmatprep.subr.bf16.mxu0 0
    %264 = vmatpush1.bf16.msra.mxu0 0
    %265 = vmatprep.subr.bf16.mxu0 0
    %266 = vmatpush1.bf16.msra.mxu0 0
    %267 = vmatprep.subr.bf16.mxu0 0
    %268 = vmatpush1.bf16.msra.mxu0 0
    %269 = vmatprep.subr.bf16.mxu0 0
    %270 = vmatpush1.bf16.msra.mxu0 0
    %271 = vmatprep.subr.bf16.mxu0 0
    %272 = vmatpush1.bf16.msra.mxu0 0
    %273 = vmatprep.subr.bf16.mxu0 0
    %274 = vmatpush1.bf16.msra.mxu0 0
    %275 = vmatprep.subr.bf16.mxu0 0
    %276 = vmatpush1.bf16.msra.mxu0 0
    %277 = vmatprep.mubr.bf16.mxu0 0
    %278 = vmatmul.mubr.bf16.gmra.mrb[0].mxu0 %v243
    %v279 = vpop.f32.mrb[0].mxu0
    %v280 = vadd.f32 %v227, %v279
    %v281 = vpop.f32.mrb[0].mxu0
    %v282 = vpop.f32.mrb[0].mxu0
    %v283 = vpop.f32.mrb[0].mxu0
    %284 = vdwg.mxu0
    %v285 = vand.u32 2147483647, %v280
    %v286 = vsub.f32 0.0, %v285
    %v287 = vmul.f32 %v286, 1.442695
    %v288 = vpow.pop %v287
    %v289 = vadd.f32 %v288, 1.0
    %v290 = vlog2.pop %v289
    %v291 = vmul.f32 %v290, 0.6931472
    %v292 = vmul.f32 -0.5, %v288
    %v293 = vadd.f32 %v292, 1.0
    %v294 = vmul.f32 %v293, %v288
    %v295 = vand.u32 2147483647, %v288
    %vm296 = vcmp.lt.f32.partialorder %v295, 0.0004427343
    %v297 = vsel %vm296, %v294, %v291
    %v298 = vmax.f32 %v280, 0.0
    %v299 = vadd.f32 %v298, %v297
    %v300 = vadd.f32 %v299, 1e-15
    %301 = vst [vmem:[#allocation3] sm:$0xff] %v300
    // Predicated region
    $region34: #{tpu_custom_call.1} parent=1 // pred_check
      _
    $region35: #{tpu_custom_call.1} parent=1 // pred_check_branch
      %303 = sbr.rel (0) target = $region37
    $region36: #{tpu_custom_call.1} parent=1 // pred_region
      %s305 = ssub.s32 128, 128
      %306 = vsyncadd [#allocation4], %s305
      %s308 = sshll.u32 [#allocation3], 4
      %s309 = int_to_ptr.vmem [resolvable:$true] %s308
      %311 = dma.vmem_to_hbm [thread:$0]  %s309, 128, %s7, [#allocation4]
    $region37: #{tpu_custom_call.1} parent=1 // pred_fallthru
      _
    // Predicated region
    $region38: #{tpu_custom_call.1} parent=1 // pred_check
      _
    $region39: #{tpu_custom_call.1} parent=1 // pred_check_branch
      %313 = sbr.rel (0) target = $region41
    $region40: #{tpu_custom_call.1} parent=1 // pred_region
      %314 = dma.done [#allocation4], 128
    $region41: #{tpu_custom_call.1} parent=1 // pred_fallthru
      _
    %315 = vsyncpa [#allocation4], 1

</llo_original>
